<compile_context>
chip_gen: v7x
topology: tpu7x:2x2x1
jax: 0.10.0
libtpu: 0.0.40
codegen_flags: <defaults>
</compile_context>

<pallas_src>
import functools

import jax
import jax.numpy as jnp
from jax import lax
from jax.experimental import pallas as pl
from jax.experimental.pallas import tpu as pltpu


def _sa_patch_kernel(x_ref, wf_ref, bf_ref, gamma_ref, out_ref, attn_ref,
                     *, c8, c, nd, dd):
    # x_ref: (C, N) for one batch element; lanes in window-element-major order.
    x = x_ref[...].astype(jnp.float32)                                  # (C, N)

    # Fused query/key/value 1x1 convolutions as a single MXU matmul.
    # (For large C/N on v6e/v7x: cast both operands to bf16 here and keep
    #  preferred_element_type=f32; kept f32 at these tiny shapes so the returned
    #  attention map stays tight to the reference.)
    qkv = jnp.dot(wf_ref[...], x, preferred_element_type=jnp.float32)
    qkv = qkv + bf_ref[...]                                             # (2*C8+C, N)

    # d x d max-pool: window-element k of pooled position nd lives at lane k*Nd+nd,
    # so the pool is an elementwise max over dd contiguous Nd-lane slices.
    pooled = qkv[:, 0:nd]
    for k in range(1, dd):
        pooled = jnp.maximum(pooled, qkv[:, k * nd:(k + 1) * nd])       # (2*C8+C, Nd)

    q = pooled[0:c8, :]                                                 # (C8, Nd)
    kmat = pooled[c8:2 * c8, :]                                         # (C8, Nd)
    v = pooled[2 * c8:2 * c8 + c, :]                                    # (C,  Nd)

    # energy[n, m] = <q[:, n], k[:, m]> — contract the channel axis directly,
    # no explicit transpose materialised.
    energy = lax.dot_general(q, kmat, (((0,), (0,)), ((), ())),
                             preferred_element_type=jnp.float32)        # (Nd, Nd)

    # Softmax over the last dim; normalise with the EUP approximate reciprocal on the
    # (Nd, 1) row-sum (+ one Newton step -> ~f32 accuracy) instead of an (Nd,Nd) divide.
    m = jnp.max(energy, axis=-1, keepdims=True)
    p = jnp.exp(energy - m)
    s = jnp.sum(p, axis=-1, keepdims=True)
    inv = pl.reciprocal(s, approx=True)
    inv = inv * (2.0 - s * inv)                                         # Newton refine
    attn = p * inv                                                      # (Nd, Nd)
    attn_ref[...] = attn.astype(attn_ref.dtype)

    # out_pooled[c, n] = sum_m v[c, m] * attn[n, m]   (== v @ attn^T)
    out_p = lax.dot_general(v, attn, (((1,), (1,)), ((), ())),
                            preferred_element_type=jnp.float32)         # (C, Nd)

    # Nearest-neighbour upsample by d: in this lane order every window element gets its
    # window's pooled value, i.e. a lane-concat of dd copies. Residual + lane-dense store.
    out_full = jnp.concatenate([out_p] * dd, axis=1)                    # (C, N)
    gamma = gamma_ref[0]                                                # SMEM scalar
    out_ref[...] = (gamma * out_full + x).astype(out_ref.dtype)


def self_attention_patch_pallas(x, wq, bq, wk, bk, wv, bv, gamma, *, downsample=4):
    """x: (B, C, W, H).  wq/wk: (C//8, C), wv: (C, C), biases 1-D, gamma scalar.

    Returns (out (B, C, W, H), attention (B, Nd, Nd)) with Nd = (W//d)*(H//d).
    """
    B, C, W, H = x.shape
    d = downsample
    assert W % d == 0 and H % d == 0, "spatial dims must be divisible by downsample"
    Wd, Hd = W // d, H // d
    Nd = Wd * Hd
    N = W * H
    DD = d * d
    C8 = wq.shape[0]
    Ct = 2 * C8 + C

    # Window-element-major permutation of the flattened spatial (lane) axis:
    #   lane = (dw*d + dh) * Nd + (wd*Hd + hd)
    xp = x.reshape(B, C, Wd, d, Hd, d)
    xp = jnp.transpose(xp, (0, 1, 3, 5, 2, 4)).reshape(B, C, N)

    # Fuse the three 1x1-conv weights/biases into one projection.
    wf = jnp.concatenate([wq, wk, wv], axis=0).astype(jnp.float32)          # (Ct, C)
    bf = jnp.concatenate([bq, bk, bv], axis=0).reshape(Ct, 1).astype(jnp.float32)
    g = jnp.asarray(gamma, jnp.float32).reshape(1)

    kernel = functools.partial(_sa_patch_kernel, c8=C8, c=C, nd=Nd, dd=DD)

    out_p, attn = pl.pallas_call(
        kernel,
        out_shape=(
            jax.ShapeDtypeStruct((B, C, N), x.dtype),
            jax.ShapeDtypeStruct((B, Nd, Nd), jnp.float32),
        ),
        grid_spec=pltpu.PrefetchScalarGridSpec(
            num_scalar_prefetch=0,
            grid=(B,),
            in_specs=[
                pl.BlockSpec((None, C, N), lambda b: (b, 0, 0)),     # x, lane-dense
                pl.BlockSpec((Ct, C), lambda b: (0, 0)),             # fused qkv weight
                pl.BlockSpec((Ct, 1), lambda b: (0, 0)),             # fused qkv bias
                pl.BlockSpec(memory_space=pltpu.MemorySpace.SMEM),   # gamma scalar
            ],
            out_specs=[
                pl.BlockSpec((None, C, N), lambda b: (b, 0, 0)),     # out, lane-dense
                pl.BlockSpec((None, Nd, Nd), lambda b: (b, 0, 0)),   # attention map
            ],
        ),
        compiler_params=pltpu.CompilerParams(
            dimension_semantics=("parallel",)),                      # B batches -> megacore
    )(xp, wf, bf, g)

    # Undo the spatial permutation on the dense output. The attention map needs no fix-up:
    # its positions are already in torch's pooled (wd, hd) row-major order.
    out = out_p.reshape(B, C, d, d, Wd, Hd)
    out = jnp.transpose(out, (0, 1, 4, 2, 5, 3)).reshape(B, C, W, H)
    return out, attn


def self_attention_patch_ref(x, wq, bq, wk, bk, wv, bv, gamma, downsample=4):
    """Pure-jnp mirror of SelfAttentionPatch.forward (conv -> maxpool -> attn -> upsample)."""
    B, C, W, H = x.shape
    d = downsample
    Wd, Hd = W // d, H // d
    Nd = Wd * Hd
    C8 = wq.shape[0]

    def conv1x1(w, b):
        return jnp.einsum('oc,bcwh->bowh', w, x) + b[None, :, None, None]

    def pool(y):
        Bc, Co = y.shape[:2]
        return jnp.max(y.reshape(Bc, Co, Wd, d, Hd, d), axis=(3, 5))

    q = pool(conv1x1(wq, bq)).reshape(B, C8, Nd)
    k = pool(conv1x1(wk, bk)).reshape(B, C8, Nd)
    v = pool(conv1x1(wv, bv)).reshape(B, C, Nd)
    energy = jnp.einsum('bon,bom->bnm', q, k)                 # proj_query @ proj_key
    attn = jax.nn.softmax(energy, axis=-1)
    out = jnp.einsum('bcm,bnm->bcn', v, attn).reshape(B, C, Wd, Hd)   # v @ attn^T
    out = jnp.repeat(jnp.repeat(out, d, axis=2), d, axis=3)   # nearest upsample x d
    return gamma * out + x, attn


if __name__ == "__main__":
    key = jax.random.PRNGKey(0)
    B, C, W, H = 2, 32, 16, 16       # in_dim = 32 -> query/key channels = 4
    d = 4                            # module default downsample
    C8 = C // 8
    Nd = (W // d) * (H // d)

    ks = jax.random.split(key, 7)
    x = jax.random.normal(ks[0], (B, C, W, H), dtype=jnp.float32)
    # 1x1 conv weights in torch (C_out, C_in) orientation.
    wq = jax.random.normal(ks[1], (C8, C), dtype=jnp.float32) * 0.1
    bq = jax.random.normal(ks[2], (C8,), dtype=jnp.float32) * 0.1
    wk = jax.random.normal(ks[3], (C8, C), dtype=jnp.float32) * 0.1
    bk = jax.random.normal(ks[4], (C8,), dtype=jnp.float32) * 0.1
    wv = jax.random.normal(ks[5], (C, C), dtype=jnp.float32) * 0.1
    bv = jax.random.normal(ks[6], (C,), dtype=jnp.float32) * 0.1
    # torch inits gamma to 0; use a nonzero value so the attention branch contributes.
    gamma = jnp.float32(0.5)

    out, attn = jax.block_until_ready(
        self_attention_patch_pallas(x, wq, bq, wk, bk, wv, bv, gamma, downsample=d))
    out_ref, attn_ref = self_attention_patch_ref(x, wq, bq, wk, bk, wv, bv, gamma, d)

    assert out.shape == (B, C, W, H) and attn.shape == (B, Nd, Nd)
    assert jnp.allclose(out, out_ref, atol=1e-3, rtol=1e-3), \
        float(jnp.max(jnp.abs(out - out_ref)))
    assert jnp.allclose(attn, attn_ref, atol=1e-3, rtol=1e-3), \
        float(jnp.max(jnp.abs(attn - attn_ref)))
    print("KERNEL_OK")
</pallas_src>

<mosaic_0001>
module attributes {stable_mosaic.version = 11 : i64} {
  func.func @_sa_patch_kernel(%arg0: i32, %arg1: memref<1x32x256xf32, #tpu.memory_space<vmem>>, %arg2: memref<40x32xf32, #tpu.memory_space<vmem>>, %arg3: memref<40x1xf32, #tpu.memory_space<vmem>>, %arg4: memref<1xf32, #tpu.memory_space<smem>>, %arg5: memref<1x32x256xf32, #tpu.memory_space<vmem>>, %arg6: memref<1x16x16xf32, #tpu.memory_space<vmem>>) attributes {dimension_semantics = [#tpu.dimension_semantics<parallel>], iteration_bounds = array<i64: 2>, scalar_prefetch = 0 : i64, scratch_operands = 0 : i64, tpu.core_type = #tpu.core_type<tc>, window_params = [{transform_indices = @transform_0, window_bounds = array<i64: 1, 32, 256>}, {pipeline_mode = #tpu.pipeline_mode<synchronous>, transform_indices = @transform_1, window_bounds = array<i64: 40, 32>}, {pipeline_mode = #tpu.pipeline_mode<synchronous>, transform_indices = @transform_2, window_bounds = array<i64: 40, 1>}, {transform_indices = @transform_3, window_bounds = array<i64: 1>}, {transform_indices = @transform_4, window_bounds = array<i64: 1, 32, 256>}, {transform_indices = @transform_5, window_bounds = array<i64: 1, 16, 16>}]} {
    %c0 = arith.constant 0 : index
    %c0_0 = arith.constant 0 : index
    %c0_1 = arith.constant 0 : index
    %0 = vector.load %arg1[%c0, %c0_0, %c0_1] : memref<1x32x256xf32, #tpu.memory_space<vmem>>, vector<1x32x256xf32>
    %1 = vector.shape_cast %0 : vector<1x32x256xf32> to vector<32x256xf32>
    %c0_2 = arith.constant 0 : index
    %c0_3 = arith.constant 0 : index
    %2 = vector.load %arg2[%c0_2, %c0_3] : memref<40x32xf32, #tpu.memory_space<vmem>>, vector<40x32xf32>
    %cst = arith.constant dense<0.000000e+00> : vector<40x256xf32>
    %3 = tpu.matmul %2, %1, %cst {dimension_numbers = #tpu.dot_dimension_numbers<[1], [0], [0], [1], [0, 0, 1, 1], [], []>} : vector<40x32xf32>, vector<32x256xf32>, vector<40x256xf32> -> vector<40x256xf32>
    %c0_4 = arith.constant 0 : index
    %c0_5 = arith.constant 0 : index
    %4 = vector.load %arg3[%c0_4, %c0_5] : memref<40x1xf32, #tpu.memory_space<vmem>>, vector<40x1xf32>
    %5 = vector.broadcast %4 : vector<40x1xf32> to vector<40x256xf32>
    %6 = arith.addf %3, %5 : vector<40x256xf32>
    %7 = vector.extract_strided_slice %6 {offsets = [0, 0], sizes = [40, 16], strides = [1, 1]} : vector<40x256xf32> to vector<40x16xf32>
    %8 = vector.extract_strided_slice %6 {offsets = [0, 16], sizes = [40, 16], strides = [1, 1]} : vector<40x256xf32> to vector<40x16xf32>
    %9 = arith.maximumf %7, %8 : vector<40x16xf32>
    %10 = vector.extract_strided_slice %6 {offsets = [0, 32], sizes = [40, 16], strides = [1, 1]} : vector<40x256xf32> to vector<40x16xf32>
    %11 = arith.maximumf %9, %10 : vector<40x16xf32>
    %12 = vector.extract_strided_slice %6 {offsets = [0, 48], sizes = [40, 16], strides = [1, 1]} : vector<40x256xf32> to vector<40x16xf32>
    %13 = arith.maximumf %11, %12 : vector<40x16xf32>
    %14 = vector.extract_strided_slice %6 {offsets = [0, 64], sizes = [40, 16], strides = [1, 1]} : vector<40x256xf32> to vector<40x16xf32>
    %15 = arith.maximumf %13, %14 : vector<40x16xf32>
    %16 = vector.extract_strided_slice %6 {offsets = [0, 80], sizes = [40, 16], strides = [1, 1]} : vector<40x256xf32> to vector<40x16xf32>
    %17 = arith.maximumf %15, %16 : vector<40x16xf32>
    %18 = vector.extract_strided_slice %6 {offsets = [0, 96], sizes = [40, 16], strides = [1, 1]} : vector<40x256xf32> to vector<40x16xf32>
    %19 = arith.maximumf %17, %18 : vector<40x16xf32>
    %20 = vector.extract_strided_slice %6 {offsets = [0, 112], sizes = [40, 16], strides = [1, 1]} : vector<40x256xf32> to vector<40x16xf32>
    %21 = arith.maximumf %19, %20 : vector<40x16xf32>
    %22 = vector.extract_strided_slice %6 {offsets = [0, 128], sizes = [40, 16], strides = [1, 1]} : vector<40x256xf32> to vector<40x16xf32>
    %23 = arith.maximumf %21, %22 : vector<40x16xf32>
    %24 = vector.extract_strided_slice %6 {offsets = [0, 144], sizes = [40, 16], strides = [1, 1]} : vector<40x256xf32> to vector<40x16xf32>
    %25 = arith.maximumf %23, %24 : vector<40x16xf32>
    %26 = vector.extract_strided_slice %6 {offsets = [0, 160], sizes = [40, 16], strides = [1, 1]} : vector<40x256xf32> to vector<40x16xf32>
    %27 = arith.maximumf %25, %26 : vector<40x16xf32>
    %28 = vector.extract_strided_slice %6 {offsets = [0, 176], sizes = [40, 16], strides = [1, 1]} : vector<40x256xf32> to vector<40x16xf32>
    %29 = arith.maximumf %27, %28 : vector<40x16xf32>
    %30 = vector.extract_strided_slice %6 {offsets = [0, 192], sizes = [40, 16], strides = [1, 1]} : vector<40x256xf32> to vector<40x16xf32>
    %31 = arith.maximumf %29, %30 : vector<40x16xf32>
    %32 = vector.extract_strided_slice %6 {offsets = [0, 208], sizes = [40, 16], strides = [1, 1]} : vector<40x256xf32> to vector<40x16xf32>
    %33 = arith.maximumf %31, %32 : vector<40x16xf32>
    %34 = vector.extract_strided_slice %6 {offsets = [0, 224], sizes = [40, 16], strides = [1, 1]} : vector<40x256xf32> to vector<40x16xf32>
    %35 = arith.maximumf %33, %34 : vector<40x16xf32>
    %36 = vector.extract_strided_slice %6 {offsets = [0, 240], sizes = [40, 16], strides = [1, 1]} : vector<40x256xf32> to vector<40x16xf32>
    %37 = arith.maximumf %35, %36 : vector<40x16xf32>
    %38 = vector.extract_strided_slice %37 {offsets = [0, 0], sizes = [4, 16], strides = [1, 1]} : vector<40x16xf32> to vector<4x16xf32>
    %39 = vector.extract_strided_slice %37 {offsets = [4, 0], sizes = [4, 16], strides = [1, 1]} : vector<40x16xf32> to vector<4x16xf32>
    %40 = vector.extract_strided_slice %37 {offsets = [8, 0], sizes = [32, 16], strides = [1, 1]} : vector<40x16xf32> to vector<32x16xf32>
    %cst_6 = arith.constant dense<0.000000e+00> : vector<16x16xf32>
    %41 = tpu.matmul %38, %39, %cst_6 {dimension_numbers = #tpu.dot_dimension_numbers<[0], [0], [1], [1], [0, 1, 1, 1], [], []>} : vector<4x16xf32>, vector<4x16xf32>, vector<16x16xf32> -> vector<16x16xf32>
    %cst_7 = arith.constant dense<0xFF800000> : vector<16xf32>
    %42 = vector.multi_reduction <maximumf>, %41, %cst_7 [1] : vector<16x16xf32> to vector<16xf32>
    %43 = vector.shape_cast %42 : vector<16xf32> to vector<16x1xf32>
    %44 = vector.broadcast %43 : vector<16x1xf32> to vector<16x16xf32>
    %45 = arith.subf %41, %44 : vector<16x16xf32>
    %46 = math.exp %45 : vector<16x16xf32>
    %cst_8 = arith.constant dense<0.000000e+00> : vector<16xf32>
    %47 = vector.multi_reduction <add>, %46, %cst_8 [1] : vector<16x16xf32> to vector<16xf32>
    %48 = vector.shape_cast %47 : vector<16xf32> to vector<16x1xf32>
    %49 = tpu.reciprocal %48 {approx = true} : vector<16x1xf32> -> vector<16x1xf32>
    %50 = arith.mulf %48, %49 : vector<16x1xf32>
    %cst_9 = arith.constant 2.000000e+00 : f32
    %51 = vector.broadcast %cst_9 : f32 to vector<16x1xf32>
    %52 = arith.subf %51, %50 : vector<16x1xf32>
    %53 = arith.mulf %49, %52 : vector<16x1xf32>
    %54 = vector.broadcast %53 : vector<16x1xf32> to vector<16x16xf32>
    %55 = arith.mulf %46, %54 : vector<16x16xf32>
    %c0_10 = arith.constant 0 : index
    %c0_11 = arith.constant 0 : index
    %c0_12 = arith.constant 0 : index
    %56 = vector.load %arg6[%c0_10, %c0_11, %c0_12] : memref<1x16x16xf32, #tpu.memory_space<vmem>>, vector<1x16x16xf32>
    %57 = vector.shape_cast %56 : vector<1x16x16xf32> to vector<16x16xf32>
    %58 = vector.shape_cast %55 : vector<16x16xf32> to vector<1x16x16xf32>
    tpu.vector_store %arg6[%c0_10, %c0_11, %c0_12], %58 {strides = array<i32>} : memref<1x16x16xf32, #tpu.memory_space<vmem>>, vector<1x16x16xf32>,
    %cst_13 = arith.constant dense<0.000000e+00> : vector<32x16xf32>
    %59 = tpu.matmul %40, %55, %cst_13 {dimension_numbers = #tpu.dot_dimension_numbers<[1], [1], [0], [0], [0, 0, 1, 0], [], []>} : vector<32x16xf32>, vector<16x16xf32>, vector<32x16xf32> -> vector<32x16xf32>
    %60 = tpu.concatenate %59, %59, %59, %59, %59, %59, %59, %59, %59, %59, %59, %59, %59, %59, %59, %59 in 1 : vector<32x16xf32>, vector<32x16xf32>, vector<32x16xf32>, vector<32x16xf32>, vector<32x16xf32>, vector<32x16xf32>, vector<32x16xf32>, vector<32x16xf32>, vector<32x16xf32>, vector<32x16xf32>, vector<32x16xf32>, vector<32x16xf32>, vector<32x16xf32>, vector<32x16xf32>, vector<32x16xf32>, vector<32x16xf32> -> vector<32x256xf32>
    %c0_14 = arith.constant 0 : index
    %61 = memref.load %arg4[%c0_14] : memref<1xf32, #tpu.memory_space<smem>>
    %62 = vector.broadcast %61 : f32 to vector<32x256xf32>
    %63 = arith.mulf %62, %60 : vector<32x256xf32>
    %64 = arith.addf %63, %1 : vector<32x256xf32>
    %c0_15 = arith.constant 0 : index
    %c0_16 = arith.constant 0 : index
    %c0_17 = arith.constant 0 : index
    %65 = vector.load %arg5[%c0_15, %c0_16, %c0_17] : memref<1x32x256xf32, #tpu.memory_space<vmem>>, vector<1x32x256xf32>
    %66 = vector.shape_cast %65 : vector<1x32x256xf32> to vector<32x256xf32>
    %67 = vector.shape_cast %64 : vector<32x256xf32> to vector<1x32x256xf32>
    tpu.vector_store %arg5[%c0_15, %c0_16, %c0_17], %67 {strides = array<i32>} : memref<1x32x256xf32, #tpu.memory_space<vmem>>, vector<1x32x256xf32>,
    return
  }
  func.func @transform_0(%arg0: i32) -> (i32, i32, i32) {
    %c0_i32 = arith.constant 0 : i32
    %c0_i32_0 = arith.constant 0 : i32
    %c0_i32_1 = arith.constant 0 : i32
    return %arg0, %c0_i32, %c0_i32_0 : i32, i32, i32
  }
  func.func @transform_1(%arg0: i32) -> (i32, i32) {
    %c0_i32 = arith.constant 0 : i32
    %c0_i32_0 = arith.constant 0 : i32
    %c0_i32_1 = arith.constant 0 : i32
    return %c0_i32, %c0_i32_0 : i32, i32
  }
  func.func @transform_2(%arg0: i32) -> (i32, i32) {
    %c0_i32 = arith.constant 0 : i32
    %c0_i32_0 = arith.constant 0 : i32
    %c0_i32_1 = arith.constant 0 : i32
    return %c0_i32, %c0_i32_0 : i32, i32
  }
  func.func @transform_3(%arg0: i32) -> i32 {
    %c0_i32 = arith.constant 0 : i32
    %c0_i32_0 = arith.constant 0 : i32
    return %c0_i32 : i32
  }
  func.func @transform_4(%arg0: i32) -> (i32, i32, i32) {
    %c0_i32 = arith.constant 0 : i32
    %c0_i32_0 = arith.constant 0 : i32
    %c0_i32_1 = arith.constant 0 : i32
    return %arg0, %c0_i32, %c0_i32_0 : i32, i32, i32
  }
  func.func @transform_5(%arg0: i32) -> (i32, i32, i32) {
    %c0_i32 = arith.constant 0 : i32
    %c0_i32_0 = arith.constant 0 : i32
    %c0_i32_1 = arith.constant 0 : i32
    return %arg0, %c0_i32, %c0_i32_0 : i32, i32, i32
  }
}

</mosaic_0001>

<llo_original>
// kernel: tpu_custom_call.1
$region0: #{tpu_custom_call.1}
  #allocation0 [shape = 'u32[]', space=smem, size = 0x4, offset = 0x4, fixed_abs, tag = 'smem constant byte address 0x4 - core index']
  #allocation1 [shape = 'u32[144,128]{1,0:T(1,128)}', space=vmem, size = 0x12000, scoped, tag = 'internal scratch']
  #allocation2 [shape = 'f32[1]{0:T(128)S(6)}', space=smem, size = 0x200, scoped, tag = 'scoped memory for tpu_custom_call.1']
  %s0 = inlined_call_operand.hbm [shape: f32[2,32,256], index: 0, kind: input, shape index: {}]
  %s1 = inlined_call_operand.vmem [shape: f32[40,32], index: 1, kind: input, shape index: {}]
  %s2 = inlined_call_operand.vmem [shape: f32[40,1], index: 2, kind: input, shape index: {}]
  %s3 = inlined_call_operand.<no memory space> [shape: f32[1], index: 3, kind: input, shape index: {}]
  %s4 = inlined_call_operand.hbm [shape: f32[2,32,256], index: 4, kind: output, shape index: {0}]
  %s5 = inlined_call_operand.hbm [shape: f32[2,16,16], index: 5, kind: output, shape index: {1}]
  %6 = xla_tuple %s4, %s5
  %s7 = sld [smem:[#allocation0]]
  $region61: #{tpu_custom_call.1} parent=0
    _
  %s9 = ssub.s32 1, %s7
  %s10 = scalar_select 0, %s9, %s7
  %11 = sst [smem:[#allocation2]] %s3
  $region1: #{tpu_custom_call.1} parent=0
    #allocation3 [shape = 'u8[65536]{0}', space=vmem, size = 0x10000, scoped, tag = 'input window, operand 0']
    #allocation4 [shape = 's32[2]{0}', space=sflag, size = 0x8, scoped, tag = 'scoped memory for tpu_custom_call.1']
    #allocation5 [shape = 's32[2]{0}', space=sflag, size = 0x8, scoped, tag = 'scoped memory for tpu_custom_call.1']
    #allocation6 [shape = 'u8[65536]{0}', space=vmem, size = 0x10000, scoped, tag = 'output window, operand 0']
    #allocation7 [shape = 'u8[16384]{0}', space=vmem, size = 0x4000, scoped, tag = 'output window, operand 1']
    #allocation8 [shape = 's32[2]{0}', space=sflag, size = 0x8, scoped, tag = 'scoped memory for tpu_custom_call.1']
    %12 = vsyncpa [#allocation4], 0
    %s13 = scalar_lea.sflag [#allocation4], 1
    %14 = vsyncpa %s13, 0
    %15 = vsyncpa [#allocation5], 0
    %s16 = scalar_lea.sflag [#allocation5], 1
    %17 = vsyncpa %s16, 0
    %18 = vsyncpa [#allocation8], 0
    %s19 = scalar_lea.sflag [#allocation8], 1
    %20 = vsyncpa %s19, 0
    loop: start=0, step=1, limit=4
    $region2: #{tpu_custom_call.1} parent=1 // loop_pre_header
      _
    $region3: #{tpu_custom_call.1} parent=1 // loop_header
      %s22 = sphi 0, %s26
      %p23 = scmp.ge.s32.totalorder %s22, 4
      %s32 = sphi 0, %s34
      %s35 = sphi 0, %s32
      %s36 = sphi 0, %s35
      %s52 = sphi 0, %s36
      %s56 = sphi 0, %s56
      %s58 = sphi 0, %s56
      %s59 = sphi 0, %s58
      %s73 = sphi 0, %s59
      %s77 = sphi 0, %s77
      %s79 = sphi 0, %s77
      %s80 = sphi 0, %s79
      %s94 = sphi 0, %s80
      %s98 = sphi 0, %s98
      %s100 = sphi 0, %s98
      %s101 = sphi 0, %s100
      %s115 = sphi 0, %s101
      %s121 = sphi 0, %s123
      %s124 = sphi 0, %s121
      %s125 = sphi 0, %s124
      %s141 = sphi 0, %s125
      %s147 = sphi 0, %s149
      %s150 = sphi 0, %s147
      %s151 = sphi 0, %s150
      %s167 = sphi 0, %s151
    $region4: #{tpu_custom_call.1} parent=1 // loop_header_branch
      %25 = sbr.rel (%p23) target = $region8
    $region5: #{tpu_custom_call.1} parent=1 // loop_body
      %s27 = ssub.s32 %s22, 1
      %s28 = ssub.s32 %s22, 2
      %s29 = sadd.s32 %s22, 1
      %s30 = ssub.s32 %s22, %s29
      %p31 = scmp.eq.s32.totalorder %s30, 0
      %s33 = sadd.s32 %s32, 1
      %s34 = scalar_select %p31, %s32, %s33
      %p37 = pneg %p31
      %p38 = scmp.eq.s32.totalorder %s22, 1
      %p39 = por %p37, %p38
      %p40 = scmp.ne.s32.totalorder %s32, %s35
      %p41 = scmp.eq.s32.totalorder %s22, 0
      %p42 = por %p40, %p41
      %p43 = scmp.ne.s32.totalorder %s32, %s35
      %p44 = scmp.eq.s32.totalorder %s27, 1
      %p45 = por %p43, %p44
      %p46 = scmp.ne.s32.totalorder %s35, %s36
      %p47 = scmp.eq.s32.totalorder %s27, 0
      %p48 = por %p46, %p47
      %p49 = scmp.ne.s32.totalorder %s35, %s36
      %p50 = scmp.eq.s32.totalorder %s28, 1
      %p51 = por %p49, %p50
      %p53 = scmp.ne.s32.totalorder %s36, %s52
      %p54 = scmp.eq.s32.totalorder %s28, 0
      %p55 = por %p53, %p54
      %s57 = sadd.s32 %s56, 1
      %p60 = scmp.eq.s32.totalorder %s22, 1
      %p61 = scmp.ne.s32.totalorder %s56, %s58
      %p62 = scmp.eq.s32.totalorder %s22, 0
      %p63 = por %p61, %p62
      %p64 = scmp.ne.s32.totalorder %s56, %s58
      %p65 = scmp.eq.s32.totalorder %s27, 1
      %p66 = por %p64, %p65
      %p67 = scmp.ne.s32.totalorder %s58, %s59
      %p68 = scmp.eq.s32.totalorder %s27, 0
      %p69 = por %p67, %p68
      %p70 = scmp.ne.s32.totalorder %s58, %s59
      %p71 = scmp.eq.s32.totalorder %s28, 1
      %p72 = por %p70, %p71
      %p74 = scmp.ne.s32.totalorder %s59, %s73
      %p75 = scmp.eq.s32.totalorder %s28, 0
      %p76 = por %p74, %p75
      %s78 = sadd.s32 %s77, 1
      %p81 = scmp.eq.s32.totalorder %s22, 1
      %p82 = scmp.ne.s32.totalorder %s77, %s79
      %p83 = scmp.eq.s32.totalorder %s22, 0
      %p84 = por %p82, %p83
      %p85 = scmp.ne.s32.totalorder %s77, %s79
      %p86 = scmp.eq.s32.totalorder %s27, 1
      %p87 = por %p85, %p86
      %p88 = scmp.ne.s32.totalorder %s79, %s80
      %p89 = scmp.eq.s32.totalorder %s27, 0
      %p90 = por %p88, %p89
      %p91 = scmp.ne.s32.totalorder %s79, %s80
      %p92 = scmp.eq.s32.totalorder %s28, 1
      %p93 = por %p91, %p92
      %p95 = scmp.ne.s32.totalorder %s80, %s94
      %p96 = scmp.eq.s32.totalorder %s28, 0
      %p97 = por %p95, %p96
      %s99 = sadd.s32 %s98, 1
      %p102 = scmp.eq.s32.totalorder %s22, 1
      %p103 = scmp.ne.s32.totalorder %s98, %s100
      %p104 = scmp.eq.s32.totalorder %s22, 0
      %p105 = por %p103, %p104
      %p106 = scmp.ne.s32.totalorder %s98, %s100
      %p107 = scmp.eq.s32.totalorder %s27, 1
      %p108 = por %p106, %p107
      %p109 = scmp.ne.s32.totalorder %s100, %s101
      %p110 = scmp.eq.s32.totalorder %s27, 0
      %p111 = por %p109, %p110
      %p112 = scmp.ne.s32.totalorder %s100, %s101
      %p113 = scmp.eq.s32.totalorder %s28, 1
      %p114 = por %p112, %p113
      %p116 = scmp.ne.s32.totalorder %s101, %s115
      %p117 = scmp.eq.s32.totalorder %s28, 0
      %p118 = por %p116, %p117
      %s119 = ssub.s32 %s22, %s29
      %p120 = scmp.eq.s32.totalorder %s119, 0
      %s122 = sadd.s32 %s121, 1
      %s123 = scalar_select %p120, %s121, %s122
      %p126 = pneg %p120
      %p127 = scmp.eq.s32.totalorder %s22, 1
      %p128 = por %p126, %p127
      %p129 = scmp.ne.s32.totalorder %s121, %s124
      %p130 = scmp.eq.s32.totalorder %s22, 0
      %p131 = por %p129, %p130
      %p132 = scmp.ne.s32.totalorder %s121, %s124
      %p133 = scmp.eq.s32.totalorder %s27, 1
      %p134 = por %p132, %p133
      %p135 = scmp.ne.s32.totalorder %s124, %s125
      %p136 = scmp.eq.s32.totalorder %s27, 0
      %p137 = por %p135, %p136
      %p138 = scmp.ne.s32.totalorder %s124, %s125
      %p139 = scmp.eq.s32.totalorder %s28, 1
      %p140 = por %p138, %p139
      %p142 = scmp.ne.s32.totalorder %s125, %s141
      %p143 = scmp.eq.s32.totalorder %s28, 0
      %p144 = por %p142, %p143
      %s145 = ssub.s32 %s22, %s29
      %p146 = scmp.eq.s32.totalorder %s145, 0
      %s148 = sadd.s32 %s147, 1
      %s149 = scalar_select %p146, %s147, %s148
      %p152 = pneg %p146
      %p153 = scmp.eq.s32.totalorder %s22, 1
      %p154 = por %p152, %p153
      %p155 = scmp.ne.s32.totalorder %s147, %s150
      %p156 = scmp.eq.s32.totalorder %s22, 0
      %p157 = por %p155, %p156
      %p158 = scmp.ne.s32.totalorder %s147, %s150
      %p159 = scmp.eq.s32.totalorder %s27, 1
      %p160 = por %p158, %p159
      %p161 = scmp.ne.s32.totalorder %s150, %s151
      %p162 = scmp.eq.s32.totalorder %s27, 0
      %p163 = por %p161, %p162
      %p164 = scmp.ne.s32.totalorder %s150, %s151
      %p165 = scmp.eq.s32.totalorder %s28, 1
      %p166 = por %p164, %p165
      %p168 = scmp.ne.s32.totalorder %s151, %s167
      %p169 = scmp.eq.s32.totalorder %s28, 0
      %p170 = por %p168, %p169
      %p171 = scmp.le.s32.totalorder 1, %s22
      %p172 = scmp.lt.s32.totalorder %s22, 3
      %p173 = pnand %p171, %p172
      %p174 = pneg %p173
      // Predicated region
      $region9: #{tpu_custom_call.1} parent=5 // pred_check
        _
      $region10: #{tpu_custom_call.1} parent=5 // pred_check_branch
        %176 = sbr.rel (%p173) target = $region12
      $region11: #{tpu_custom_call.1} parent=5 // pred_region
        %s177 = ssub.s32 %s22, 1
        // Predicated region
        $region13: #{tpu_custom_call.1} parent=11 // pred_check
          %p178 = pneg %p69
        $region14: #{tpu_custom_call.1} parent=11 // pred_check_branch
          %180 = sbr.rel (%p178) target = $region16
        $region15: #{tpu_custom_call.1} parent=11 // pred_region
          _
        $region16: #{tpu_custom_call.1} parent=11 // pred_fallthru
          _
        // Predicated region
        $region17: #{tpu_custom_call.1} parent=11 // pred_check
          %p181 = pneg %p90
        $region18: #{tpu_custom_call.1} parent=11 // pred_check_branch
          %183 = sbr.rel (%p181) target = $region20
        $region19: #{tpu_custom_call.1} parent=11 // pred_region
          _
        $region20: #{tpu_custom_call.1} parent=11 // pred_fallthru
          _
        // Predicated region
        $region21: #{tpu_custom_call.1} parent=11 // pred_check
          %p184 = pneg %p111
        $region22: #{tpu_custom_call.1} parent=11 // pred_check_branch
          %186 = sbr.rel (%p184) target = $region24
        $region23: #{tpu_custom_call.1} parent=11 // pred_region
          _
        $region24: #{tpu_custom_call.1} parent=11 // pred_fallthru
          _
      $region12: #{tpu_custom_call.1} parent=5 // pred_fallthru
        _
      %p187 = scmp.lt.s32.totalorder %s22, 2
      // Predicated region
      $region25: #{tpu_custom_call.1} parent=5 // pred_check
        %p188 = pneg %p187
      $region26: #{tpu_custom_call.1} parent=5 // pred_check_branch
        %190 = sbr.rel (%p188) target = $region28
      $region27: #{tpu_custom_call.1} parent=5 // pred_region
        // Predicated region
        $region29: #{tpu_custom_call.1} parent=27 // pred_check
          %p191 = pneg %p42
        $region30: #{tpu_custom_call.1} parent=27 // pred_check_branch
          %193 = sbr.rel (%p191) target = $region32
        $region31: #{tpu_custom_call.1} parent=27 // pred_region
          %s194 = sand.u32 %s32, 1
          %s195 = scalar_lea.sflag [#allocation4], %s194
          %s196 = sand.u32 %s32, 1
          %s197 = smul.addr %s196, 64
          %s198 = scalar_lea.vmem [#allocation3], %s197
          %s200 = ssub.s32 1024, 1024
          %201 = vsyncadd %s195, %s200
          %s202 = smul.addr %s22, 8
          %s203 = smul.addr %s202, 128
          %s204 = scalar_lea.hbm %s0, %s203
          %s205 = sshll.u32 %s198, 4
          %s206 = int_to_ptr.vmem [resolvable:$true] %s205
          %211 = dma.hbm_to_vmem [thread:$0]  %s204, 1024, %s206, %s195, 256, 256, 16
        $region32: #{tpu_custom_call.1} parent=27 // pred_fallthru
          _
      $region28: #{tpu_custom_call.1} parent=5 // pred_fallthru
        _
      %p212 = scmp.le.s32.totalorder 1, %s22
      %p213 = scmp.lt.s32.totalorder %s22, 3
      %p214 = pnand %p212, %p213
      %p215 = pneg %p214
      // Predicated region
      $region33: #{tpu_custom_call.1} parent=5 // pred_check
        _
      $region34: #{tpu_custom_call.1} parent=5 // pred_check_branch
        %217 = sbr.rel (%p214) target = $region36
      $region35: #{tpu_custom_call.1} parent=5 // pred_region
        %s218 = ssub.s32 %s22, 1
        %s219 = sand.u32 %s35, 1
        %s220 = scalar_lea.sflag [#allocation4], %s219
        %s221 = sand.u32 %s35, 1
        %s222 = smul.addr %s221, 64
        %s223 = scalar_lea.vmem [#allocation3], %s222
        // Predicated region
        $region37: #{tpu_custom_call.1} parent=35 // pred_check
          %p224 = pneg %p48
        $region38: #{tpu_custom_call.1} parent=35 // pred_check_branch
          %226 = sbr.rel (%p224) target = $region40
        $region39: #{tpu_custom_call.1} parent=35 // pred_region
          %227 = dma.done %s220, 1024
        $region40: #{tpu_custom_call.1} parent=35 // pred_fallthru
          _
        %s228 = sand.u32 %s35, 1
        %s229 = scalar_lea.sflag [#allocation4], %s228
        %s230 = sand.u32 %s35, 1
        %s231 = smul.addr %s230, 64
        %s232 = scalar_lea.vmem [#allocation3], %s231
        %p233 = pneg %p48
        %p234 = pneg %p45
        %p235 = pneg %p69
        %p236 = pneg %p66
        %p237 = pneg %p90
        %p238 = pneg %p87
        %p239 = pneg %p111
        %p240 = pneg %p108
        %p241 = pneg %p137
        %p242 = pneg %p134
        %s243 = sand.u32 %s124, 1
        %s244 = scalar_lea.sflag [#allocation5], %s243
        %s245 = sand.u32 %s124, 1
        %s246 = smul.addr %s245, 64
        %s247 = scalar_lea.vmem [#allocation6], %s246
        %p248 = pneg %p163
        %p249 = pneg %p160
        %s250 = sand.u32 %s150, 1
        %s251 = scalar_lea.sflag [#allocation8], %s250
        %s252 = sand.u32 %s150, 1
        %s253 = smul.addr %s252, 16
        %s254 = scalar_lea.vmem [#allocation7], %s253
        %v255 = vld [vmem:[%s223] sm:$0xff]
        %v256 = vld [vmem:[%s223 + $0x8] sm:$0xff]
        %v257 = vld [vmem:[%s223 + $0x10] sm:$0xff]
        %v258 = vld [vmem:[%s223 + $0x18] sm:$0xff]
        %v259 = vld [vmem:[%s223 + $0x20] sm:$0xff]
        %v260 = vld [vmem:[%s223 + $0x28] sm:$0xff]
        %v261 = vld [vmem:[%s223 + $0x30] sm:$0xff]
        %v262 = vld [vmem:[%s223 + $0x38] sm:$0xff]
        %v263 = vld [vmem:[%s1] sm:$0xff]
        %v264 = vld [vmem:[%s1 + $0x8] sm:$0xff]
        %v265 = vld [vmem:[%s1 + $0x10] sm:$0xff]
        %v266 = vld [vmem:[%s1 + $0x18] sm:$0xff]
        %v267 = vld [vmem:[%s1 + $0x20] sm:$0xff]
        %v268 = vld [vmem:[%s2] sm:$0xff]
        %v269 = vld [vmem:[%s2 + $0x8] sm:$0xff]
        %v270 = vld [vmem:[%s2 + $0x10] sm:$0xff]
        %v271 = vld [vmem:[%s2 + $0x18] sm:$0xff]
        %v272 = vld [vmem:[%s2 + $0x20] sm:$0xff]
        %274 = vset.pattern.permute.xlu0 0
        %275 = vperm.xlu0 %274, %v268
        %v276 = vpop.permute.xlu0 %275
        %279 = vset.pattern.permute.xlu0 0
        %280 = vperm.xlu0 %279, %v269
        %v281 = vpop.permute.xlu0 %280
        %284 = vset.pattern.permute.xlu0 0
        %285 = vperm.xlu0 %284, %v270
        %v286 = vpop.permute.xlu0 %285
        %289 = vset.pattern.permute.xlu0 0
        %290 = vperm.xlu0 %289, %v271
        %v291 = vpop.permute.xlu0 %290
        %294 = vset.pattern.permute.xlu0 0
        %295 = vperm.xlu0 %294, %v272
        %v296 = vpop.permute.xlu0 %295
        %vm298 = vcmask 261120
        %v300 = vsel %vm298, %v263, 0
        %v303 = vsel %vm298, %v264, 0
        %v306 = vsel %vm298, %v265, 0
        %v309 = vsel %vm298, %v266, 0
        %v312 = vsel %vm298, %v267, 0
        %314 = vmatprep.subr.mxu0 %v256
        %315 = vmatpush1.msra.mxu0 %v255
        %316 = vmatprep.subr.mxu0 %v258
        %317 = vmatpush1.msra.mxu0 %v257
        %318 = vmatprep.subr.mxu0 %v260
        %319 = vmatpush1.msra.mxu0 %v259
        %320 = vmatprep.subr.mxu0 %v262
        %321 = vmatpush1.msra.mxu0 %v261
        %322 = vmatprep.subr.mxu0 0.0
        %323 = vmatpush1.msra.mxu0 0.0
        %324 = vmatprep.subr.mxu0 0.0
        %325 = vmatpush1.msra.mxu0 0.0
        %326 = vmatprep.subr.mxu0 0.0
        %327 = vmatpush1.msra.mxu0 0.0
        %328 = vmatprep.subr.mxu0 0.0
        %329 = vmatpush1.msra.mxu0 0.0
        %330 = vmatprep.subr.mxu0 0.0
        %331 = vmatpush1.msra.mxu0 0.0
        %332 = vmatprep.subr.mxu0 0.0
        %333 = vmatpush1.msra.mxu0 0.0
        %334 = vmatprep.subr.mxu0 0.0
        %335 = vmatpush1.msra.mxu0 0.0
        %336 = vmatprep.subr.mxu0 0.0
        %337 = vmatpush1.msra.mxu0 0.0
        %338 = vmatprep.subr.mxu0 0.0
        %339 = vmatpush1.msra.mxu0 0.0
        %340 = vmatprep.subr.mxu0 0.0
        %341 = vmatpush1.msra.mxu0 0.0
        %342 = vmatprep.subr.mxu0 0.0
        %343 = vmatpush1.msra.mxu0 0.0
        %344 = vmatprep.subr.mxu0 0.0
        %345 = vmatpush1.msra.mxu0 0.0
        %346 = vmatprep.subr.mxu0 0.0
        %347 = vmatpush1.msra.mxu0 0.0
        %348 = vmatprep.subr.mxu0 0.0
        %349 = vmatpush1.msra.mxu0 0.0
        %350 = vmatprep.subr.mxu0 0.0
        %351 = vmatpush1.msra.mxu0 0.0
        %352 = vmatprep.subr.mxu0 0.0
        %353 = vmatpush1.msra.mxu0 0.0
        %354 = vmatprep.subr.mxu0 0.0
        %355 = vmatpush1.msra.mxu0 0.0
        %356 = vmatprep.subr.mxu0 0.0
        %357 = vmatpush1.msra.mxu0 0.0
        %358 = vmatprep.subr.mxu0 0.0
        %359 = vmatpush1.msra.mxu0 0.0
        %360 = vmatprep.subr.mxu0 0.0
        %361 = vmatpush1.msra.mxu0 0.0
        %362 = vmatprep.subr.mxu0 0.0
        %363 = vmatpush1.msra.mxu0 0.0
        %364 = vmatprep.subr.mxu0 0.0
        %365 = vmatpush1.msra.mxu0 0.0
        %366 = vmatprep.subr.mxu0 0.0
        %367 = vmatpush1.msra.mxu0 0.0
        %368 = vmatprep.subr.mxu0 0.0
        %369 = vmatpush1.msra.mxu0 0.0
        %370 = vmatprep.subr.mxu0 0.0
        %371 = vmatpush1.msra.mxu0 0.0
        %372 = vmatprep.subr.mxu0 0.0
        %373 = vmatpush1.msra.mxu0 0.0
        %374 = vmatprep.subr.mxu0 0.0
        %375 = vmatpush1.msra.mxu0 0.0
        %376 = vmatprep.subr.mxu0 0.0
        %377 = vmatpush1.msra.mxu0 0.0
        %378 = vmatprep.mubr.f32.mxu0 0.0
        %379 = vmatmul.mubr.f32.gmra.mrb[0].mxu0 %v300
        %v380 = vpop.f32.mrb[0].mxu0
        %v381 = vadd.f32 %v276, %v380
        %v382 = vpop.f32.mrb[0].mxu0
        %v383 = vadd.f32 %v276, %v382
        %384 = vmatprep.mubr.f32.mxu0 0.0
        %385 = vmatmul.mubr.f32.gmra.mrb[0].mxu0 %v303
        %v386 = vpop.f32.mrb[0].mxu0
        %v387 = vadd.f32 %v281, %v386
        %v388 = vpop.f32.mrb[0].mxu0
        %v389 = vadd.f32 %v281, %v388
        %390 = vmatprep.mubr.f32.mxu0 0.0
        %391 = vmatmul.mubr.f32.gmra.mrb[0].mxu0 %v306
        %v392 = vpop.f32.mrb[0].mxu0
        %v393 = vadd.f32 %v286, %v392
        %v394 = vpop.f32.mrb[0].mxu0
        %v395 = vadd.f32 %v286, %v394
        %396 = vmatprep.mubr.f32.mxu0 0.0
        %397 = vmatmul.mubr.f32.gmra.mrb[0].mxu0 %v309
        %v398 = vpop.f32.mrb[0].mxu0
        %v399 = vadd.f32 %v291, %v398
        %v400 = vpop.f32.mrb[0].mxu0
        %v401 = vadd.f32 %v291, %v400
        %402 = vmatprep.mubr.f32.mxu0 0.0
        %403 = vmatmul.mubr.f32.gmra.mrb[0].mxu0 %v312
        %v404 = vpop.f32.mrb[0].mxu0
        %v405 = vadd.f32 %v296, %v404
        %v406 = vpop.f32.mrb[0].mxu0
        %v407 = vadd.f32 %v296, %v406
        %408 = vdwg.mxu0
        %414 = vrot.lane.b32.xlu0 %v381, 112
        %v415 = vpop.permute.xlu0 %414
        %416 = vrot.lane.b32.xlu0 %v387, 112
        %v417 = vpop.permute.xlu0 %416
        %418 = vrot.lane.b32.xlu0 %v393, 112
        %v419 = vpop.permute.xlu0 %418
        %420 = vrot.lane.b32.xlu0 %v399, 112
        %v421 = vpop.permute.xlu0 %420
        %422 = vrot.lane.b32.xlu0 %v405, 112
        %v423 = vpop.permute.xlu0 %422
        %v429 = vmax.f32 %v381, %v415
        %v430 = vmax.f32 %v387, %v417
        %v431 = vmax.f32 %v393, %v419
        %v432 = vmax.f32 %v399, %v421
        %v433 = vmax.f32 %v405, %v423
        %434 = vrot.lane.b32.xlu0 %v381, 96
        %v435 = vpop.permute.xlu0 %434
        %436 = vrot.lane.b32.xlu0 %v387, 96
        %v437 = vpop.permute.xlu0 %436
        %438 = vrot.lane.b32.xlu0 %v393, 96
        %v439 = vpop.permute.xlu0 %438
        %440 = vrot.lane.b32.xlu0 %v399, 96
        %v441 = vpop.permute.xlu0 %440
        %442 = vrot.lane.b32.xlu0 %v405, 96
        %v443 = vpop.permute.xlu0 %442
        %v449 = vmax.f32 %v429, %v435
        %v450 = vmax.f32 %v430, %v437
        %v451 = vmax.f32 %v431, %v439
        %v452 = vmax.f32 %v432, %v441
        %v453 = vmax.f32 %v433, %v443
        %454 = vrot.lane.b32.xlu0 %v381, 80
        %v455 = vpop.permute.xlu0 %454
        %456 = vrot.lane.b32.xlu0 %v387, 80
        %v457 = vpop.permute.xlu0 %456
        %458 = vrot.lane.b32.xlu0 %v393, 80
        %v459 = vpop.permute.xlu0 %458
        %460 = vrot.lane.b32.xlu0 %v399, 80
        %v461 = vpop.permute.xlu0 %460
        %462 = vrot.lane.b32.xlu0 %v405, 80
        %v463 = vpop.permute.xlu0 %462
        %v469 = vmax.f32 %v449, %v455
        %v470 = vmax.f32 %v450, %v457
        %v471 = vmax.f32 %v451, %v459
        %v472 = vmax.f32 %v452, %v461
        %v473 = vmax.f32 %v453, %v463
        %474 = vrot.lane.b32.xlu0 %v381, 64
        %v475 = vpop.permute.xlu0 %474
        %476 = vrot.lane.b32.xlu0 %v387, 64
        %v477 = vpop.permute.xlu0 %476
        %478 = vrot.lane.b32.xlu0 %v393, 64
        %v479 = vpop.permute.xlu0 %478
        %480 = vrot.lane.b32.xlu0 %v399, 64
        %v481 = vpop.permute.xlu0 %480
        %482 = vrot.lane.b32.xlu0 %v405, 64
        %v483 = vpop.permute.xlu0 %482
        %v489 = vmax.f32 %v469, %v475
        %v490 = vmax.f32 %v470, %v477
        %v491 = vmax.f32 %v471, %v479
        %v492 = vmax.f32 %v472, %v481
        %v493 = vmax.f32 %v473, %v483
        %494 = vrot.lane.b32.xlu0 %v381, 48
        %v495 = vpop.permute.xlu0 %494
        %496 = vrot.lane.b32.xlu0 %v387, 48
        %v497 = vpop.permute.xlu0 %496
        %498 = vrot.lane.b32.xlu0 %v393, 48
        %v499 = vpop.permute.xlu0 %498
        %500 = vrot.lane.b32.xlu0 %v399, 48
        %v501 = vpop.permute.xlu0 %500
        %502 = vrot.lane.b32.xlu0 %v405, 48
        %v503 = vpop.permute.xlu0 %502
        %v509 = vmax.f32 %v489, %v495
        %v510 = vmax.f32 %v490, %v497
        %v511 = vmax.f32 %v491, %v499
        %v512 = vmax.f32 %v492, %v501
        %v513 = vmax.f32 %v493, %v503
        %514 = vrot.lane.b32.xlu0 %v381, 32
        %v515 = vpop.permute.xlu0 %514
        %516 = vrot.lane.b32.xlu0 %v387, 32
        %v517 = vpop.permute.xlu0 %516
        %518 = vrot.lane.b32.xlu0 %v393, 32
        %v519 = vpop.permute.xlu0 %518
        %520 = vrot.lane.b32.xlu0 %v399, 32
        %v521 = vpop.permute.xlu0 %520
        %522 = vrot.lane.b32.xlu0 %v405, 32
        %v523 = vpop.permute.xlu0 %522
        %v529 = vmax.f32 %v509, %v515
        %v530 = vmax.f32 %v510, %v517
        %v531 = vmax.f32 %v511, %v519
        %v532 = vmax.f32 %v512, %v521
        %v533 = vmax.f32 %v513, %v523
        %534 = vrot.lane.b32.xlu0 %v381, 16
        %v535 = vpop.permute.xlu0 %534
        %536 = vrot.lane.b32.xlu0 %v387, 16
        %v537 = vpop.permute.xlu0 %536
        %538 = vrot.lane.b32.xlu0 %v393, 16
        %v539 = vpop.permute.xlu0 %538
        %540 = vrot.lane.b32.xlu0 %v399, 16
        %v541 = vpop.permute.xlu0 %540
        %542 = vrot.lane.b32.xlu0 %v405, 16
        %v543 = vpop.permute.xlu0 %542
        %v549 = vmax.f32 %v529, %v535
        %v550 = vmax.f32 %v530, %v537
        %v551 = vmax.f32 %v531, %v539
        %v552 = vmax.f32 %v532, %v541
        %v553 = vmax.f32 %v533, %v543
        %v554 = vmax.f32 %v549, %v383
        %v555 = vmax.f32 %v550, %v389
        %v556 = vmax.f32 %v551, %v395
        %v557 = vmax.f32 %v552, %v401
        %v558 = vmax.f32 %v553, %v407
        %564 = vrot.lane.b32.xlu0 %v383, 112
        %v565 = vpop.permute.xlu0 %564
        %566 = vrot.lane.b32.xlu0 %v389, 112
        %v567 = vpop.permute.xlu0 %566
        %568 = vrot.lane.b32.xlu0 %v395, 112
        %v569 = vpop.permute.xlu0 %568
        %570 = vrot.lane.b32.xlu0 %v401, 112
        %v571 = vpop.permute.xlu0 %570
        %572 = vrot.lane.b32.xlu0 %v407, 112
        %v573 = vpop.permute.xlu0 %572
        %v579 = vmax.f32 %v554, %v565
        %v580 = vmax.f32 %v555, %v567
        %v581 = vmax.f32 %v556, %v569
        %v582 = vmax.f32 %v557, %v571
        %v583 = vmax.f32 %v558, %v573
        %584 = vrot.lane.b32.xlu0 %v383, 96
        %v585 = vpop.permute.xlu0 %584
        %586 = vrot.lane.b32.xlu0 %v389, 96
        %v587 = vpop.permute.xlu0 %586
        %588 = vrot.lane.b32.xlu0 %v395, 96
        %v589 = vpop.permute.xlu0 %588
        %590 = vrot.lane.b32.xlu0 %v401, 96
        %v591 = vpop.permute.xlu0 %590
        %592 = vrot.lane.b32.xlu0 %v407, 96
        %v593 = vpop.permute.xlu0 %592
        %v599 = vmax.f32 %v579, %v585
        %v600 = vmax.f32 %v580, %v587
        %v601 = vmax.f32 %v581, %v589
        %v602 = vmax.f32 %v582, %v591
        %v603 = vmax.f32 %v583, %v593
        %604 = vrot.lane.b32.xlu0 %v383, 80
        %v605 = vpop.permute.xlu0 %604
        %606 = vrot.lane.b32.xlu0 %v389, 80
        %v607 = vpop.permute.xlu0 %606
        %608 = vrot.lane.b32.xlu0 %v395, 80
        %v609 = vpop.permute.xlu0 %608
        %610 = vrot.lane.b32.xlu0 %v401, 80
        %v611 = vpop.permute.xlu0 %610
        %612 = vrot.lane.b32.xlu0 %v407, 80
        %v613 = vpop.permute.xlu0 %612
        %v619 = vmax.f32 %v599, %v605
        %v620 = vmax.f32 %v600, %v607
        %v621 = vmax.f32 %v601, %v609
        %v622 = vmax.f32 %v602, %v611
        %v623 = vmax.f32 %v603, %v613
        %624 = vrot.lane.b32.xlu0 %v383, 64
        %v625 = vpop.permute.xlu0 %624
        %626 = vrot.lane.b32.xlu0 %v389, 64
        %v627 = vpop.permute.xlu0 %626
        %628 = vrot.lane.b32.xlu0 %v395, 64
        %v629 = vpop.permute.xlu0 %628
        %630 = vrot.lane.b32.xlu0 %v401, 64
        %v631 = vpop.permute.xlu0 %630
        %632 = vrot.lane.b32.xlu0 %v407, 64
        %v633 = vpop.permute.xlu0 %632
        %v639 = vmax.f32 %v619, %v625
        %v640 = vmax.f32 %v620, %v627
        %v641 = vmax.f32 %v621, %v629
        %v642 = vmax.f32 %v622, %v631
        %v643 = vmax.f32 %v623, %v633
        %644 = vrot.lane.b32.xlu0 %v383, 48
        %v645 = vpop.permute.xlu0 %644
        %646 = vrot.lane.b32.xlu0 %v389, 48
        %v647 = vpop.permute.xlu0 %646
        %648 = vrot.lane.b32.xlu0 %v395, 48
        %v649 = vpop.permute.xlu0 %648
        %650 = vrot.lane.b32.xlu0 %v401, 48
        %v651 = vpop.permute.xlu0 %650
        %652 = vrot.lane.b32.xlu0 %v407, 48
        %v653 = vpop.permute.xlu0 %652
        %v659 = vmax.f32 %v639, %v645
        %v660 = vmax.f32 %v640, %v647
        %v661 = vmax.f32 %v641, %v649
        %v662 = vmax.f32 %v642, %v651
        %v663 = vmax.f32 %v643, %v653
        %664 = vrot.lane.b32.xlu0 %v383, 32
        %v665 = vpop.permute.xlu0 %664
        %666 = vrot.lane.b32.xlu0 %v389, 32
        %v667 = vpop.permute.xlu0 %666
        %668 = vrot.lane.b32.xlu0 %v395, 32
        %v669 = vpop.permute.xlu0 %668
        %670 = vrot.lane.b32.xlu0 %v401, 32
        %v671 = vpop.permute.xlu0 %670
        %672 = vrot.lane.b32.xlu0 %v407, 32
        %v673 = vpop.permute.xlu0 %672
        %v679 = vmax.f32 %v659, %v665
        %v680 = vmax.f32 %v660, %v667
        %v681 = vmax.f32 %v661, %v669
        %v682 = vmax.f32 %v662, %v671
        %v683 = vmax.f32 %v663, %v673
        %684 = vrot.lane.b32.xlu0 %v383, 16
        %v685 = vpop.permute.xlu0 %684
        %686 = vrot.lane.b32.xlu0 %v389, 16
        %v687 = vpop.permute.xlu0 %686
        %688 = vrot.lane.b32.xlu0 %v395, 16
        %v689 = vpop.permute.xlu0 %688
        %690 = vrot.lane.b32.xlu0 %v401, 16
        %v691 = vpop.permute.xlu0 %690
        %692 = vrot.lane.b32.xlu0 %v407, 16
        %v693 = vpop.permute.xlu0 %692
        %v699 = vmax.f32 %v679, %v685
        %v700 = vmax.f32 %v680, %v687
        %v701 = vmax.f32 %v681, %v689
        %v702 = vmax.f32 %v682, %v691
        %v703 = vmax.f32 %v683, %v693
        %704 = vxpose.xlu0.b32.start [1/16] %v699, 128
        %705 = vxpose.xlu0.b32.cont [2/16] 0.0, 128
        %706 = vxpose.xlu0.b32.cont [3/16] 0.0, 128
        %707 = vxpose.xlu0.b32.cont [4/16] 0.0, 128
        %708 = vxpose.xlu0.b32.cont [5/16] 0.0, 128
        %709 = vxpose.xlu0.b32.cont [6/16] 0.0, 128
        %710 = vxpose.xlu0.b32.cont [7/16] 0.0, 128
        %711 = vxpose.xlu0.b32.cont [8/16] 0.0, 128
        %712 = vxpose.xlu0.b32.cont [9/16] 0.0, 128
        %713 = vxpose.xlu0.b32.cont [10/16] 0.0, 128
        %714 = vxpose.xlu0.b32.cont [11/16] 0.0, 128
        %715 = vxpose.xlu0.b32.cont [12/16] 0.0, 128
        %716 = vxpose.xlu0.b32.cont [13/16] 0.0, 128
        %717 = vxpose.xlu0.b32.cont [14/16] 0.0, 128
        %718 = vxpose.xlu0.b32.cont [15/16] 0.0, 128
        %719 = vxpose.xlu0.b32.end [16/16] 0.0, 128
        %v720 = vpop.trf.xlu0
        %v721 = vpop.trf.xlu0
        %v722 = vpop.trf.xlu0
        %v723 = vpop.trf.xlu0
        %v724 = vpop.trf.xlu0
        %v725 = vpop.trf.xlu0
        %v726 = vpop.trf.xlu0
        %v727 = vpop.trf.xlu0
        %v728 = vpop.trf.xlu0
        %v729 = vpop.trf.xlu0
        %v730 = vpop.trf.xlu0
        %v731 = vpop.trf.xlu0
        %v732 = vpop.trf.xlu0
        %v733 = vpop.trf.xlu0
        %v734 = vpop.trf.xlu0
        %v735 = vpop.trf.xlu0
        %v737 = vrot.slane %v699, 4
        %vm738 = vcmask 31744
        %v740 = vsel %vm738, %v720, 0
        %v743 = vsel %vm738, %v721, 0
        %vm745 = vcmask 1043456
        %v746 = vsel %vm745, %v737, 0
        %748 = vmatprep.subr.mxu0 0.0
        %749 = vmatpush1.msra.mxu0 %v746
        %750 = vmatprep.subr.mxu0 0.0
        %751 = vmatpush1.msra.mxu0 0.0
        %752 = vmatprep.subr.mxu0 0.0
        %753 = vmatpush1.msra.mxu0 0.0
        %754 = vmatprep.subr.mxu0 0.0
        %755 = vmatpush1.msra.mxu0 0.0
        %756 = vmatprep.subr.mxu0 0.0
        %757 = vmatpush1.msra.mxu0 0.0
        %758 = vmatprep.subr.mxu0 0.0
        %759 = vmatpush1.msra.mxu0 0.0
        %760 = vmatprep.subr.mxu0 0.0
        %761 = vmatpush1.msra.mxu0 0.0
        %762 = vmatprep.subr.mxu0 0.0
        %763 = vmatpush1.msra.mxu0 0.0
        %764 = vmatprep.subr.mxu0 0.0
        %765 = vmatpush1.msra.mxu0 0.0
        %766 = vmatprep.subr.mxu0 0.0
        %767 = vmatpush1.msra.mxu0 0.0
        %768 = vmatprep.subr.mxu0 0.0
        %769 = vmatpush1.msra.mxu0 0.0
        %770 = vmatprep.subr.mxu0 0.0
        %771 = vmatpush1.msra.mxu0 0.0
        %772 = vmatprep.subr.mxu0 0.0
        %773 = vmatpush1.msra.mxu0 0.0
        %774 = vmatprep.subr.mxu0 0.0
        %775 = vmatpush1.msra.mxu0 0.0
        %776 = vmatprep.subr.mxu0 0.0
        %777 = vmatpush1.msra.mxu0 0.0
        %778 = vmatprep.subr.mxu0 0.0
        %779 = vmatpush1.msra.mxu0 0.0
        %780 = vmatprep.subr.mxu0 0.0
        %781 = vmatpush1.msra.mxu0 0.0
        %782 = vmatprep.subr.mxu0 0.0
        %783 = vmatpush1.msra.mxu0 0.0
        %784 = vmatprep.subr.mxu0 0.0
        %785 = vmatpush1.msra.mxu0 0.0
        %786 = vmatprep.subr.mxu0 0.0
        %787 = vmatpush1.msra.mxu0 0.0
        %788 = vmatprep.subr.mxu0 0.0
        %789 = vmatpush1.msra.mxu0 0.0
        %790 = vmatprep.subr.mxu0 0.0
        %791 = vmatpush1.msra.mxu0 0.0
        %792 = vmatprep.subr.mxu0 0.0
        %793 = vmatpush1.msra.mxu0 0.0
        %794 = vmatprep.subr.mxu0 0.0
        %795 = vmatpush1.msra.mxu0 0.0
        %796 = vmatprep.subr.mxu0 0.0
        %797 = vmatpush1.msra.mxu0 0.0
        %798 = vmatprep.subr.mxu0 0.0
        %799 = vmatpush1.msra.mxu0 0.0
        %800 = vmatprep.subr.mxu0 0.0
        %801 = vmatpush1.msra.mxu0 0.0
        %802 = vmatprep.subr.mxu0 0.0
        %803 = vmatpush1.msra.mxu0 0.0
        %804 = vmatprep.subr.mxu0 0.0
        %805 = vmatpush1.msra.mxu0 0.0
        %806 = vmatprep.subr.mxu0 0.0
        %807 = vmatpush1.msra.mxu0 0.0
        %808 = vmatprep.subr.mxu0 0.0
        %809 = vmatpush1.msra.mxu0 0.0
        %810 = vmatprep.subr.mxu0 0.0
        %811 = vmatpush1.msra.mxu0 0.0
        %812 = vmatprep.mubr.f32.mxu0 0.0
        %813 = vmatmul.mubr.f32.gmra.mrb[0].mxu0 %v740
        %v814 = vpop.f32.mrb[0].mxu0
        %v815 = vadd.f32 0.0, %v814
        %v816 = vpop.f32.mrb[0].mxu0
        %817 = vmatprep.mubr.f32.mxu0 0.0
        %818 = vmatmul.mubr.f32.gmra.mrb[0].mxu0 %v743
        %v819 = vpop.f32.mrb[0].mxu0
        %v820 = vadd.f32 0.0, %v819
        %v821 = vpop.f32.mrb[0].mxu0
        %822 = vdwg.mxu0
        %vm823 = vcmask 130048
        %v824 = vsel %vm823, %v815, -inf
        %825 = vmax.xlane.f32.xlu0 %v824
        %v826 = vpop.xlane.xlu0 %825
        %v827 = vsel %vm823, %v820, -inf
        %828 = vmax.xlane.f32.xlu0 %v827
        %v829 = vpop.xlane.xlu0 %828
        %v830 = vsub.f32 %v815, %v826
        %v831 = vsub.f32 %v820, %v829
        %v832 = vmul.f32 %v830, 1.442695
        %v833 = vpow.pop %v832
        %v834 = vmul.f32 %v831, 1.442695
        %v835 = vpow.pop %v834
        %v836 = vsel %vm823, %v833, 0.0
        %837 = vadd.xlane.f32.xlu0 %v836
        %v838 = vpop.xlane.xlu0 %837
        %v839 = vsel %vm823, %v835, 0.0
        %840 = vadd.xlane.f32.xlu0 %v839
        %v841 = vpop.xlane.xlu0 %840
        %v842 = vrcp.pop %v838
        %v843 = vrcp.pop %v841
        %v844 = vmul.f32 %v838, %v842
        %v845 = vmul.f32 %v841, %v843
        %v846 = vsub.f32 2.0, %v844
        %v847 = vsub.f32 2.0, %v845
        %v848 = vmul.f32 %v842, %v846
        %v849 = vmul.f32 %v843, %v847
        %v850 = vmul.f32 %v833, %v848
        %v851 = vmul.f32 %v835, %v849
        %852 = vst.msk [vmem:[%s254] sm:$0xff] %vm823, %v850
        %853 = vst.msk [vmem:[%s254 + $0x8] sm:$0xff] %vm823, %v851
        %v855 = vsel %vm823, %v700, 0
        %v858 = vsel %vm823, %v701, 0
        %v861 = vsel %vm823, %v702, 0
        %v864 = vsel %vm823, %v703, 0
        %v867 = vsel %vm823, %v850, 0
        %v870 = vsel %vm823, %v851, 0
        %872 = vmatprep.subr.mxu0 0.0
        %873 = vmatpush1.xpose.msra.mxu0 %v867
        %874 = vmatprep.subr.mxu0 0.0
        %875 = vmatpush1.xpose.msra.mxu0 %v870
        %876 = vmatprep.subr.mxu0 0.0
        %877 = vmatpush1.xpose.msra.mxu0 0.0
        %878 = vmatprep.subr.mxu0 0.0
        %879 = vmatpush1.xpose.msra.mxu0 0.0
        %880 = vmatprep.subr.mxu0 0.0
        %881 = vmatpush1.xpose.msra.mxu0 0.0
        %882 = vmatprep.subr.mxu0 0.0
        %883 = vmatpush1.xpose.msra.mxu0 0.0
        %884 = vmatprep.subr.mxu0 0.0
        %885 = vmatpush1.xpose.msra.mxu0 0.0
        %886 = vmatprep.subr.mxu0 0.0
        %887 = vmatpush1.xpose.msra.mxu0 0.0
        %888 = vmatprep.subr.mxu0 0.0
        %889 = vmatpush1.xpose.msra.mxu0 0.0
        %890 = vmatprep.subr.mxu0 0.0
        %891 = vmatpush1.xpose.msra.mxu0 0.0
        %892 = vmatprep.subr.mxu0 0.0
        %893 = vmatpush1.xpose.msra.mxu0 0.0
        %894 = vmatprep.subr.mxu0 0.0
        %895 = vmatpush1.xpose.msra.mxu0 0.0
        %896 = vmatprep.subr.mxu0 0.0
        %897 = vmatpush1.xpose.msra.mxu0 0.0
        %898 = vmatprep.subr.mxu0 0.0
        %899 = vmatpush1.xpose.msra.mxu0 0.0
        %900 = vmatprep.subr.mxu0 0.0
        %901 = vmatpush1.xpose.msra.mxu0 0.0
        %902 = vmatprep.subr.mxu0 0.0
        %903 = vmatpush1.xpose.msra.mxu0 0.0
        %904 = vmatprep.subr.mxu0 0.0
        %905 = vmatpush1.xpose.msra.mxu0 0.0
        %906 = vmatprep.subr.mxu0 0.0
        %907 = vmatpush1.xpose.msra.mxu0 0.0
        %908 = vmatprep.subr.mxu0 0.0
        %909 = vmatpush1.xpose.msra.mxu0 0.0
        %910 = vmatprep.subr.mxu0 0.0
        %911 = vmatpush1.xpose.msra.mxu0 0.0
        %912 = vmatprep.subr.mxu0 0.0
        %913 = vmatpush1.xpose.msra.mxu0 0.0
        %914 = vmatprep.subr.mxu0 0.0
        %915 = vmatpush1.xpose.msra.mxu0 0.0
        %916 = vmatprep.subr.mxu0 0.0
        %917 = vmatpush1.xpose.msra.mxu0 0.0
        %918 = vmatprep.subr.mxu0 0.0
        %919 = vmatpush1.xpose.msra.mxu0 0.0
        %920 = vmatprep.subr.mxu0 0.0
        %921 = vmatpush1.xpose.msra.mxu0 0.0
        %922 = vmatprep.subr.mxu0 0.0
        %923 = vmatpush1.xpose.msra.mxu0 0.0
        %924 = vmatprep.subr.mxu0 0.0
        %925 = vmatpush1.xpose.msra.mxu0 0.0
        %926 = vmatprep.subr.mxu0 0.0
        %927 = vmatpush1.xpose.msra.mxu0 0.0
        %928 = vmatprep.subr.mxu0 0.0
        %929 = vmatpush1.xpose.msra.mxu0 0.0
        %930 = vmatprep.subr.mxu0 0.0
        %931 = vmatpush1.xpose.msra.mxu0 0.0
        %932 = vmatprep.subr.mxu0 0.0
        %933 = vmatpush1.xpose.msra.mxu0 0.0
        %934 = vmatprep.subr.mxu0 0.0
        %935 = vmatpush1.xpose.msra.mxu0 0.0
        %936 = vmatprep.mubr.f32.mxu0 0.0
        %937 = vmatmul.mubr.f32.gmra.mrb[0].mxu0 %v855
        %v938 = vpop.f32.mrb[0].mxu0
        %v939 = vadd.f32 0.0, %v938
        %v940 = vpop.f32.mrb[0].mxu0
        %941 = vmatprep.mubr.f32.mxu0 0.0
        %942 = vmatmul.mubr.f32.gmra.mrb[0].mxu0 %v858
        %v943 = vpop.f32.mrb[0].mxu0
        %v944 = vadd.f32 0.0, %v943
        %v945 = vpop.f32.mrb[0].mxu0
        %946 = vmatprep.mubr.f32.mxu0 0.0
        %947 = vmatmul.mubr.f32.gmra.mrb[0].mxu0 %v861
        %v948 = vpop.f32.mrb[0].mxu0
        %v949 = vadd.f32 0.0, %v948
        %v950 = vpop.f32.mrb[0].mxu0
        %951 = vmatprep.mubr.f32.mxu0 0.0
        %952 = vmatmul.mubr.f32.gmra.mrb[0].mxu0 %v864
        %v953 = vpop.f32.mrb[0].mxu0
        %v954 = vadd.f32 0.0, %v953
        %v955 = vpop.f32.mrb[0].mxu0
        %956 = vdwg.mxu0
        %961 = vrot.lane.b32.xlu0 %v939, 16
        %v962 = vpop.permute.xlu0 %961
        %963 = vrot.lane.b32.xlu0 %v944, 16
        %v964 = vpop.permute.xlu0 %963
        %965 = vrot.lane.b32.xlu0 %v949, 16
        %v966 = vpop.permute.xlu0 %965
        %967 = vrot.lane.b32.xlu0 %v954, 16
        %v968 = vpop.permute.xlu0 %967
        %973 = vrot.lane.b32.xlu0 %v939, 32
        %v974 = vpop.permute.xlu0 %973
        %975 = vrot.lane.b32.xlu0 %v944, 32
        %v976 = vpop.permute.xlu0 %975
        %977 = vrot.lane.b32.xlu0 %v949, 32
        %v978 = vpop.permute.xlu0 %977
        %979 = vrot.lane.b32.xlu0 %v954, 32
        %v980 = vpop.permute.xlu0 %979
        %985 = vrot.lane.b32.xlu0 %v939, 48
        %v986 = vpop.permute.xlu0 %985
        %987 = vrot.lane.b32.xlu0 %v944, 48
        %v988 = vpop.permute.xlu0 %987
        %989 = vrot.lane.b32.xlu0 %v949, 48
        %v990 = vpop.permute.xlu0 %989
        %991 = vrot.lane.b32.xlu0 %v954, 48
        %v992 = vpop.permute.xlu0 %991
        %997 = vrot.lane.b32.xlu0 %v939, 64
        %v998 = vpop.permute.xlu0 %997
        %999 = vrot.lane.b32.xlu0 %v944, 64
        %v1000 = vpop.permute.xlu0 %999
        %1001 = vrot.lane.b32.xlu0 %v949, 64
        %v1002 = vpop.permute.xlu0 %1001
        %1003 = vrot.lane.b32.xlu0 %v954, 64
        %v1004 = vpop.permute.xlu0 %1003
        %1009 = vrot.lane.b32.xlu0 %v939, 80
        %v1010 = vpop.permute.xlu0 %1009
        %1011 = vrot.lane.b32.xlu0 %v944, 80
        %v1012 = vpop.permute.xlu0 %1011
        %1013 = vrot.lane.b32.xlu0 %v949, 80
        %v1014 = vpop.permute.xlu0 %1013
        %1015 = vrot.lane.b32.xlu0 %v954, 80
        %v1016 = vpop.permute.xlu0 %1015
        %1021 = vrot.lane.b32.xlu0 %v939, 96
        %v1022 = vpop.permute.xlu0 %1021
        %1023 = vrot.lane.b32.xlu0 %v944, 96
        %v1024 = vpop.permute.xlu0 %1023
        %1025 = vrot.lane.b32.xlu0 %v949, 96
        %v1026 = vpop.permute.xlu0 %1025
        %1027 = vrot.lane.b32.xlu0 %v954, 96
        %v1028 = vpop.permute.xlu0 %1027
        %1033 = vrot.lane.b32.xlu0 %v939, 112
        %v1034 = vpop.permute.xlu0 %1033
        %1035 = vrot.lane.b32.xlu0 %v944, 112
        %v1036 = vpop.permute.xlu0 %1035
        %1037 = vrot.lane.b32.xlu0 %v949, 112
        %v1038 = vpop.permute.xlu0 %1037
        %1039 = vrot.lane.b32.xlu0 %v954, 112
        %v1040 = vpop.permute.xlu0 %1039
        %v1045 = vsel %vm823, %v939, %v962
        %v1046 = vsel %vm823, %v944, %v964
        %v1047 = vsel %vm823, %v949, %v966
        %v1048 = vsel %vm823, %v954, %v968
        %v1049 = vsel %vm298, %v1045, %v974
        %v1050 = vsel %vm298, %v1046, %v976
        %v1051 = vsel %vm298, %v1047, %v978
        %v1052 = vsel %vm298, %v1048, %v980
        %vm1053 = vcmask 392192
        %v1054 = vsel %vm1053, %v1049, %v986
        %v1055 = vsel %vm1053, %v1050, %v988
        %v1056 = vsel %vm1053, %v1051, %v990
        %v1057 = vsel %vm1053, %v1052, %v992
        %vm1058 = vcmask 523264
        %v1059 = vsel %vm1058, %v1054, %v998
        %v1060 = vsel %vm1058, %v1055, %v1000
        %v1061 = vsel %vm1058, %v1056, %v1002
        %v1062 = vsel %vm1058, %v1057, %v1004
        %vm1063 = vcmask 654336
        %v1064 = vsel %vm1063, %v1059, %v1010
        %v1065 = vsel %vm1063, %v1060, %v1012
        %v1066 = vsel %vm1063, %v1061, %v1014
        %v1067 = vsel %vm1063, %v1062, %v1016
        %vm1068 = vcmask 785408
        %v1069 = vsel %vm1068, %v1064, %v1022
        %v1070 = vsel %vm1068, %v1065, %v1024
        %v1071 = vsel %vm1068, %v1066, %v1026
        %v1072 = vsel %vm1068, %v1067, %v1028
        %vm1073 = vcmask 916480
        %v1074 = vsel %vm1073, %v1069, %v1034
        %v1075 = vsel %vm1073, %v1070, %v1036
        %v1076 = vsel %vm1073, %v1071, %v1038
        %v1077 = vsel %vm1073, %v1072, %v1040
        %s1078 = sld [smem:[#allocation2]]
        %v1079 = vstv %s1078
        %v1080 = vmul.f32 %v1079, %v1074
        %v1081 = vmul.f32 %v1079, %v1075
        %v1082 = vmul.f32 %v1079, %v1076
        %v1083 = vmul.f32 %v1079, %v1077
        %v1084 = vadd.f32 %v1080, %v255
        %v1085 = vadd.f32 %v1080, %v256
        %v1086 = vadd.f32 %v1081, %v257
        %v1087 = vadd.f32 %v1081, %v258
        %v1088 = vadd.f32 %v1082, %v259
        %v1089 = vadd.f32 %v1082, %v260
        %v1090 = vadd.f32 %v1083, %v261
        %v1091 = vadd.f32 %v1083, %v262
        %1092 = vst [vmem:[%s247] sm:$0xff] %v1084
        %1093 = vst [vmem:[%s247 + $0x8] sm:$0xff] %v1085
        %1094 = vst [vmem:[%s247 + $0x10] sm:$0xff] %v1086
        %1095 = vst [vmem:[%s247 + $0x18] sm:$0xff] %v1087
        %1096 = vst [vmem:[%s247 + $0x20] sm:$0xff] %v1088
        %1097 = vst [vmem:[%s247 + $0x28] sm:$0xff] %v1089
        %1098 = vst [vmem:[%s247 + $0x30] sm:$0xff] %v1090
        %1099 = vst [vmem:[%s247 + $0x38] sm:$0xff] %v1091
        %s1100 = sand.u32 %s124, 1
        %s1101 = scalar_lea.sflag [#allocation5], %s1100
        %s1102 = sand.u32 %s124, 1
        %s1103 = smul.addr %s1102, 64
        %s1104 = scalar_lea.vmem [#allocation6], %s1103
        %s1105 = sand.u32 %s150, 1
        %s1106 = scalar_lea.sflag [#allocation8], %s1105
        %s1107 = sand.u32 %s150, 1
        %s1108 = smul.addr %s1107, 16
        %s1109 = scalar_lea.vmem [#allocation7], %s1108
        // Predicated region
        $region41: #{tpu_custom_call.1} parent=35 // pred_check
          %p1110 = pneg %p134
        $region42: #{tpu_custom_call.1} parent=35 // pred_check_branch
          %1112 = sbr.rel (%p1110) target = $region44
        $region43: #{tpu_custom_call.1} parent=35 // pred_region
          %s1114 = ssub.s32 1024, 1024
          %1115 = vsyncadd %s1101, %s1114
          %s1116 = smul.addr %s27, 8
          %s1117 = smul.addr %s1116, 128
          %s1118 = scalar_lea.hbm %s4, %s1117
          %s1119 = sshll.u32 %s1104, 4
          %s1120 = int_to_ptr.vmem [resolvable:$true] %s1119
          %1125 = dma.vmem_to_hbm [thread:$0]  %s1120, 1024, %s1118, %s1101, 256, 256, 16
        $region44: #{tpu_custom_call.1} parent=35 // pred_fallthru
          _
        // Predicated region
        $region45: #{tpu_custom_call.1} parent=35 // pred_check
          %p1126 = pneg %p160
        $region46: #{tpu_custom_call.1} parent=35 // pred_check_branch
          %1128 = sbr.rel (%p1126) target = $region48
        $region47: #{tpu_custom_call.1} parent=35 // pred_region
          %s1130 = ssub.s32 256, 256
          %1131 = vsyncadd %s1106, %s1130
          %s1132 = smul.addr %s27, 2
          %s1133 = smul.addr %s1132, 128
          %s1134 = scalar_lea.hbm %s5, %s1133
          %s1135 = sshll.u32 %s1109, 4
          %s1136 = int_to_ptr.vmem [resolvable:$true] %s1135
          %1141 = dma.vmem_to_hbm [thread:$0]  %s1136, 256, %s1134, %s1106, 128, 128, 8
        $region48: #{tpu_custom_call.1} parent=35 // pred_fallthru
          _
      $region36: #{tpu_custom_call.1} parent=5 // pred_fallthru
        _
      %p1142 = scmp.le.s32.totalorder 2, %s22
      // Predicated region
      $region49: #{tpu_custom_call.1} parent=5 // pred_check
        %p1143 = pneg %p1142
      $region50: #{tpu_custom_call.1} parent=5 // pred_check_branch
        %1145 = sbr.rel (%p1143) target = $region52
      $region51: #{tpu_custom_call.1} parent=5 // pred_region
        %s1146 = ssub.s32 %s22, 2
        // Predicated region
        $region53: #{tpu_custom_call.1} parent=51 // pred_check
          %p1147 = pneg %p140
        $region54: #{tpu_custom_call.1} parent=51 // pred_check_branch
          %1149 = sbr.rel (%p1147) target = $region56
        $region55: #{tpu_custom_call.1} parent=51 // pred_region
          %s1150 = sand.u32 %s125, 1
          %s1151 = scalar_lea.sflag [#allocation5], %s1150
          %s1152 = sand.u32 %s125, 1
          %s1153 = smul.addr %s1152, 64
          %s1154 = scalar_lea.vmem [#allocation6], %s1153
          %1155 = dma.done %s1151, 1024
        $region56: #{tpu_custom_call.1} parent=51 // pred_fallthru
          _
        // Predicated region
        $region57: #{tpu_custom_call.1} parent=51 // pred_check
          %p1156 = pneg %p166
        $region58: #{tpu_custom_call.1} parent=51 // pred_check_branch
          %1158 = sbr.rel (%p1156) target = $region60
        $region59: #{tpu_custom_call.1} parent=51 // pred_region
          %s1159 = sand.u32 %s151, 1
          %s1160 = scalar_lea.sflag [#allocation8], %s1159
          %s1161 = sand.u32 %s151, 1
          %s1162 = smul.addr %s1161, 16
          %s1163 = scalar_lea.vmem [#allocation7], %s1162
          %1164 = dma.done %s1160, 256
        $region60: #{tpu_custom_call.1} parent=51 // pred_fallthru
          _
      $region52: #{tpu_custom_call.1} parent=5 // pred_fallthru
        _
    $region6: #{tpu_custom_call.1} parent=1 // loop_footer
      %s26 = sadd.s32 1, %s22
    $region7: #{tpu_custom_call.1} parent=1 // loop_footer_branch
      %21 = sbr.rel target = $region3
    $region8: #{tpu_custom_call.1} parent=1 // loop_exit
      _
    %1165 = vsyncpa [#allocation4], 1
    %s1166 = scalar_lea.sflag [#allocation4], 1
    %1167 = vsyncpa %s1166, 1
    %1168 = vsyncpa [#allocation5], 1
    %s1169 = scalar_lea.sflag [#allocation5], 1
    %1170 = vsyncpa %s1169, 1
    %1171 = vsyncpa [#allocation8], 1
    %s1172 = scalar_lea.sflag [#allocation8], 1
    %1173 = vsyncpa %s1172, 1

</llo_original>
